<compile_context>
chip_gen: v5e
topology: v5e:2x2
jax: 0.10.0
libtpu: 0.0.40
codegen_flags: <defaults>
</compile_context>

<pallas_src>
import math
from functools import partial

import jax
import jax.numpy as jnp
from jax.experimental import pallas as pl
from jax.experimental.pallas import tpu as pltpu

FOURIER_ORDER = 4          # Fourier(fourier_order=4)
IN_FEATURES = 2            # init_size = fourier_order*4 + 2  ->  x.shape[1] == 2
HIDDEN = 32                # Simple(hidden_size=...)  (small, TPU-friendly)
NUM_HIDDEN_LAYERS = 3      # Simple(num_hidden_layers=...)


def _fourier_mlp_kernel(fourier_order, x_ref, w0_ref, wh_ref, bh_ref, wl_ref,
                        bl_ref, o_ref):
    """Batch-on-lanes fused Fourier-feature MLP.

    x_ref  : (F, TB)   f32 input tile, batch on lanes (lane-dense load)
    w0_ref : (H, KF)   bf16 packed layer-0 weights; columns =
                       [x | cos1 sin1 ... cos(K-1) sin(K-1) | bias | zero-pad]
                       (n=0 terms + bias folded into the bias column on host)
    wh_ref : (L, H, H) bf16 stacked hidden weights (torch [out, in] layout)
    bh_ref : (L, H, 1) f32 hidden biases
    wl_ref : (1, H)    bf16 final weight;  bl_ref : (1, 1) f32 final bias
    o_ref  : (1, TB)   lane-dense output tile
    """
    x = x_ref[...]                                            # (F, TB) f32

    # Fourier harmonics n>=1: one EUP cos + one EUP sin, then VPU-only
    # angle-addition recurrence for the higher harmonics.
    rows = [x]
    if fourier_order > 1:
        px = x * math.pi
        c1 = jnp.cos(px)
        s1 = jnp.sin(px)
        c, s = c1, s1
        for n in range(1, fourier_order):
            rows.append(c)
            rows.append(s)
            if n + 1 < fourier_order:
                c, s = c * c1 - s * s1, s * c1 + c * s1

    # Ones row carries the folded layer-0 bias; extra ones rows pad the K dim
    # to a multiple of 8 sublanes (their weight columns are zero).
    ones = jnp.ones_like(x[:1])                               # (1, TB)
    n_rows = x.shape[0] * (2 * fourier_order - 1) + 1
    rows.extend([ones] * (1 + (-n_rows) % 8))
    feat = jnp.concatenate(rows, axis=0).astype(jnp.bfloat16)  # (KF, TB) bf16

    # --- layer 0: Fourier expansion + Linear + bias in a single MXU pass -----
    h = jnp.maximum(
        jnp.dot(w0_ref[...], feat, preferred_element_type=jnp.float32), 0.0)

    # --- hidden layers: Linear + ReLU (bf16 operands, f32 accumulate) --------
    for li in range(wh_ref.shape[0]):
        h = jnp.maximum(
            jnp.dot(wh_ref[li], h.astype(jnp.bfloat16),
                    preferred_element_type=jnp.float32) + bh_ref[li],
            0.0)

    # --- final Linear + Sigmoid (EUP exp + approx reciprocal, no f32 divide) -
    z = jnp.dot(wl_ref[...], h.astype(jnp.bfloat16),
                preferred_element_type=jnp.float32) + bl_ref[...]
    o_ref[...] = pl.reciprocal(1.0 + jnp.exp(-z), approx=True).astype(o_ref.dtype)


def _pack_params(params, fourier_order, in_features):
    """params: torch-style list of (W [out, in], b [out]) for the 5 Linears."""
    (w0, b0), *hidden, (wl, bl) = params
    F = in_features
    # Fold n=0 Fourier terms: cos(0)=1 -> bias, sin(0)=0 -> dropped.
    b0_eff = b0 + w0[:, F:2 * F].sum(axis=1)                  # (H,)
    cols = [w0[:, 0:F]]                                       # x term
    for n in range(1, fourier_order):
        base = F + 2 * F * n
        cols.append(w0[:, base:base + F])                     # cos_n
        cols.append(w0[:, base + F:base + 2 * F])             # sin_n
    cols.append(b0_eff[:, None])                              # ones-row (bias)
    n_rows = F * (2 * fourier_order - 1) + 1
    pad = (-n_rows) % 8
    if pad:
        cols.append(jnp.zeros((w0.shape[0], pad), w0.dtype))  # zero-weight pad
    w0_packed = jnp.concatenate(cols, axis=1).astype(jnp.bfloat16)   # (H, KF)
    wh = jnp.stack([w for w, _ in hidden], axis=0).astype(jnp.bfloat16)  # (L,H,H)
    bh = jnp.stack([b[:, None] for _, b in hidden], axis=0)             # (L,H,1)
    return w0_packed, wh, bh, wl.astype(jnp.bfloat16), bl[:, None]


def fourier_forward(x, params, *, fourier_order=FOURIER_ORDER, block_b=2048):
    """x: (B, F) float32; params: torch-layout list of (W[out,in], b[out])."""
    B, F = x.shape
    assert block_b % 128 == 0, "batch tile must be lane-aligned (multiple of 128)"

    w0p, wh, bh, wl, bl = _pack_params(params, fourier_order, F)

    # Lane-aligned batch tile: as large as requested, but clamped so we get
    # >= 2 grid steps when possible (v7x has 2 TensorCores to shard across).
    half_aligned = pl.cdiv(pl.cdiv(B, 2), 128) * 128
    bb = max(128, min(block_b, half_aligned))
    grid_b = pl.cdiv(B, bb)
    bp = grid_b * bb

    xt = x.T                       # (F, B); ragged last block read directly —
                                   # garbage lanes are per-lane and sliced away.

    in_specs = [
        pl.BlockSpec((F, bb), lambda i: (0, i)),
        pl.BlockSpec(w0p.shape, lambda i: (0, 0)),
        pl.BlockSpec(wh.shape, lambda i: (0, 0, 0)),
        pl.BlockSpec(bh.shape, lambda i: (0, 0, 0)),
        pl.BlockSpec(wl.shape, lambda i: (0, 0)),
        pl.BlockSpec(bl.shape, lambda i: (0, 0)),
    ]
    out_specs = pl.BlockSpec((1, bb), lambda i: (0, i))        # lane-dense store

    out = pl.pallas_call(
        partial(_fourier_mlp_kernel, fourier_order),
        out_shape=jax.ShapeDtypeStruct((1, bp), jnp.float32),
        grid_spec=pl.GridSpec(
            grid=(grid_b,),
            in_specs=in_specs,
            out_specs=out_specs,
        ),
        compiler_params=pltpu.CompilerParams(dimension_semantics=("parallel",)),
    )(xt, w0p, wh, bh, wl, bl)

    return out[0, :B][:, None]                                 # back to (B, 1)


def init_params(key, fourier_order=FOURIER_ORDER, hidden=HIDDEN,
                num_hidden_layers=NUM_HIDDEN_LAYERS, in_features=IN_FEATURES):
    """Deterministic torch.nn.Linear-style init: U(-1/sqrt(fan_in)); W is [out, in]."""
    init_size = fourier_order * 4 + in_features
    sizes = [init_size] + [hidden] * (num_hidden_layers + 1) + [1]
    params = []
    for i in range(len(sizes) - 1):
        fan_in, fan_out = sizes[i], sizes[i + 1]
        key, kw, kb = jax.random.split(key, 3)
        bound = 1.0 / math.sqrt(fan_in)
        w = jax.random.uniform(kw, (fan_out, fan_in), jnp.float32, -bound, bound)
        b = jax.random.uniform(kb, (fan_out,), jnp.float32, -bound, bound)
        params.append((w, b))
    return params


def reference_forward(x, params, fourier_order=FOURIER_ORDER):
    """Pure-JAX f32 mirror of the PyTorch forward (concat then MLP, torch [out,in] weights)."""
    series = [x]
    for n in range(fourier_order):
        series.append(jnp.cos(n * x * math.pi))
        series.append(jnp.sin(n * x * math.pi))
    h = jnp.concatenate(series, axis=1)
    n_lin = len(params)
    for i, (w, b) in enumerate(params):
        h = h @ w.T + b
        h = jnp.maximum(h, 0.0) if i < n_lin - 1 else jax.nn.sigmoid(h)
    return h


if __name__ == "__main__":
    key = jax.random.PRNGKey(0)
    kx, kp = jax.random.split(key)

    # Small demo: ragged batch (exercises the ragged last block) with 2 grid steps.
    B = 300
    x = jax.random.normal(kx, (B, IN_FEATURES), dtype=jnp.float32)
    params = init_params(kp)

    out = fourier_forward(x, params)
    out = jax.block_until_ready(out)

    ref = reference_forward(x, params)
    assert out.shape == (B, 1)
    # bf16 MXU operands + approx-reciprocal sigmoid -> compare with loosened tolerance.
    if not jnp.allclose(out, ref, atol=2e-2, rtol=2e-2):
        raise AssertionError("Pallas kernel does not match reference forward")

    print("KERNEL_OK")
</pallas_src>

<mosaic_0001>
module attributes {stable_mosaic.version = 11 : i64} {
  func.func @_fourier_mlp_kernel(%arg0: i32, %arg1: memref<2x256xf32, #tpu.memory_space<vmem>>, %arg2: memref<32x16xbf16, #tpu.memory_space<vmem>>, %arg3: memref<3x32x32xbf16, #tpu.memory_space<vmem>>, %arg4: memref<3x32x1xf32, #tpu.memory_space<vmem>>, %arg5: memref<1x32xbf16, #tpu.memory_space<vmem>>, %arg6: memref<1x1xf32, #tpu.memory_space<vmem>>, %arg7: memref<1x256xf32, #tpu.memory_space<vmem>>) attributes {dimension_semantics = [#tpu.dimension_semantics<parallel>], iteration_bounds = array<i64: 2>, scalar_prefetch = 0 : i64, scratch_operands = 0 : i64, tpu.core_type = #tpu.core_type<tc>, window_params = [{transform_indices = @transform_0, window_bounds = array<i64: 2, 256>}, {pipeline_mode = #tpu.pipeline_mode<synchronous>, transform_indices = @transform_1, window_bounds = array<i64: 32, 16>}, {pipeline_mode = #tpu.pipeline_mode<synchronous>, transform_indices = @transform_2, window_bounds = array<i64: 3, 32, 32>}, {pipeline_mode = #tpu.pipeline_mode<synchronous>, transform_indices = @transform_3, window_bounds = array<i64: 3, 32, 1>}, {pipeline_mode = #tpu.pipeline_mode<synchronous>, transform_indices = @transform_4, window_bounds = array<i64: 1, 32>}, {pipeline_mode = #tpu.pipeline_mode<synchronous>, transform_indices = @transform_5, window_bounds = array<i64: 1, 1>}, {transform_indices = @transform_6, window_bounds = array<i64: 1, 256>}]} {
    %c0 = arith.constant 0 : index
    %c0_0 = arith.constant 0 : index
    %0 = vector.load %arg1[%c0, %c0_0] : memref<2x256xf32, #tpu.memory_space<vmem>>, vector<2x256xf32>
    %cst = arith.constant 3.14159274 : f32
    %1 = vector.broadcast %cst : f32 to vector<2x256xf32>
    %2 = arith.mulf %0, %1 : vector<2x256xf32>
    %3 = math.cos %2 : vector<2x256xf32>
    %4 = math.sin %2 : vector<2x256xf32>
    %5 = arith.mulf %3, %3 : vector<2x256xf32>
    %6 = arith.mulf %4, %4 : vector<2x256xf32>
    %7 = arith.subf %5, %6 : vector<2x256xf32>
    %8 = arith.mulf %4, %3 : vector<2x256xf32>
    %9 = arith.mulf %3, %4 : vector<2x256xf32>
    %10 = arith.addf %8, %9 : vector<2x256xf32>
    %11 = arith.mulf %7, %3 : vector<2x256xf32>
    %12 = arith.mulf %10, %4 : vector<2x256xf32>
    %13 = arith.subf %11, %12 : vector<2x256xf32>
    %14 = arith.mulf %10, %3 : vector<2x256xf32>
    %15 = arith.mulf %7, %4 : vector<2x256xf32>
    %16 = arith.addf %14, %15 : vector<2x256xf32>
    %cst_1 = arith.constant 1.000000e+00 : f32
    %17 = vector.broadcast %cst_1 : f32 to vector<1x256xf32>
    %18 = tpu.concatenate %0, %3, %4, %7, %10, %13, %16, %17, %17 in 0 : vector<2x256xf32>, vector<2x256xf32>, vector<2x256xf32>, vector<2x256xf32>, vector<2x256xf32>, vector<2x256xf32>, vector<2x256xf32>, vector<1x256xf32>, vector<1x256xf32> -> vector<16x256xf32>
    %19 = arith.truncf %18 : vector<16x256xf32> to vector<16x256xbf16>
    %c0_2 = arith.constant 0 : index
    %c0_3 = arith.constant 0 : index
    %20 = vector.load %arg2[%c0_2, %c0_3] : memref<32x16xbf16, #tpu.memory_space<vmem>>, vector<32x16xbf16>
    %cst_4 = arith.constant dense<0.000000e+00> : vector<32x256xf32>
    %21 = tpu.matmul %20, %19, %cst_4 {dimension_numbers = #tpu.dot_dimension_numbers<[1], [0], [0], [1], [0, 0, 1, 1], [], []>} : vector<32x16xbf16>, vector<16x256xbf16>, vector<32x256xf32> -> vector<32x256xf32>
    %cst_5 = arith.constant 0.000000e+00 : f32
    %22 = vector.broadcast %cst_5 : f32 to vector<32x256xf32>
    %23 = arith.maximumf %21, %22 : vector<32x256xf32>
    %c0_6 = arith.constant 0 : index
    %c0_7 = arith.constant 0 : index
    %c0_8 = arith.constant 0 : index
    %24 = vector.load %arg3[%c0_6, %c0_7, %c0_8] : memref<3x32x32xbf16, #tpu.memory_space<vmem>>, vector<1x32x32xbf16>
    %25 = vector.shape_cast %24 : vector<1x32x32xbf16> to vector<32x32xbf16>
    %26 = arith.truncf %23 : vector<32x256xf32> to vector<32x256xbf16>
    %cst_9 = arith.constant dense<0.000000e+00> : vector<32x256xf32>
    %27 = tpu.matmul %25, %26, %cst_9 {dimension_numbers = #tpu.dot_dimension_numbers<[1], [0], [0], [1], [0, 0, 1, 1], [], []>} : vector<32x32xbf16>, vector<32x256xbf16>, vector<32x256xf32> -> vector<32x256xf32>
    %c0_10 = arith.constant 0 : index
    %c0_11 = arith.constant 0 : index
    %c0_12 = arith.constant 0 : index
    %28 = vector.load %arg4[%c0_10, %c0_11, %c0_12] : memref<3x32x1xf32, #tpu.memory_space<vmem>>, vector<1x32x1xf32>
    %29 = vector.shape_cast %28 : vector<1x32x1xf32> to vector<32x1xf32>
    %30 = vector.broadcast %29 : vector<32x1xf32> to vector<32x256xf32>
    %31 = arith.addf %27, %30 : vector<32x256xf32>
    %cst_13 = arith.constant 0.000000e+00 : f32
    %32 = vector.broadcast %cst_13 : f32 to vector<32x256xf32>
    %33 = arith.maximumf %31, %32 : vector<32x256xf32>
    %c1 = arith.constant 1 : index
    %c0_14 = arith.constant 0 : index
    %c0_15 = arith.constant 0 : index
    %34 = vector.load %arg3[%c1, %c0_14, %c0_15] : memref<3x32x32xbf16, #tpu.memory_space<vmem>>, vector<1x32x32xbf16>
    %35 = vector.shape_cast %34 : vector<1x32x32xbf16> to vector<32x32xbf16>
    %36 = arith.truncf %33 : vector<32x256xf32> to vector<32x256xbf16>
    %cst_16 = arith.constant dense<0.000000e+00> : vector<32x256xf32>
    %37 = tpu.matmul %35, %36, %cst_16 {dimension_numbers = #tpu.dot_dimension_numbers<[1], [0], [0], [1], [0, 0, 1, 1], [], []>} : vector<32x32xbf16>, vector<32x256xbf16>, vector<32x256xf32> -> vector<32x256xf32>
    %c1_17 = arith.constant 1 : index
    %c0_18 = arith.constant 0 : index
    %c0_19 = arith.constant 0 : index
    %38 = vector.load %arg4[%c1_17, %c0_18, %c0_19] : memref<3x32x1xf32, #tpu.memory_space<vmem>>, vector<1x32x1xf32>
    %39 = vector.shape_cast %38 : vector<1x32x1xf32> to vector<32x1xf32>
    %40 = vector.broadcast %39 : vector<32x1xf32> to vector<32x256xf32>
    %41 = arith.addf %37, %40 : vector<32x256xf32>
    %cst_20 = arith.constant 0.000000e+00 : f32
    %42 = vector.broadcast %cst_20 : f32 to vector<32x256xf32>
    %43 = arith.maximumf %41, %42 : vector<32x256xf32>
    %c2 = arith.constant 2 : index
    %c0_21 = arith.constant 0 : index
    %c0_22 = arith.constant 0 : index
    %44 = vector.load %arg3[%c2, %c0_21, %c0_22] : memref<3x32x32xbf16, #tpu.memory_space<vmem>>, vector<1x32x32xbf16>
    %45 = vector.shape_cast %44 : vector<1x32x32xbf16> to vector<32x32xbf16>
    %46 = arith.truncf %43 : vector<32x256xf32> to vector<32x256xbf16>
    %cst_23 = arith.constant dense<0.000000e+00> : vector<32x256xf32>
    %47 = tpu.matmul %45, %46, %cst_23 {dimension_numbers = #tpu.dot_dimension_numbers<[1], [0], [0], [1], [0, 0, 1, 1], [], []>} : vector<32x32xbf16>, vector<32x256xbf16>, vector<32x256xf32> -> vector<32x256xf32>
    %c2_24 = arith.constant 2 : index
    %c0_25 = arith.constant 0 : index
    %c0_26 = arith.constant 0 : index
    %48 = vector.load %arg4[%c2_24, %c0_25, %c0_26] : memref<3x32x1xf32, #tpu.memory_space<vmem>>, vector<1x32x1xf32>
    %49 = vector.shape_cast %48 : vector<1x32x1xf32> to vector<32x1xf32>
    %50 = vector.broadcast %49 : vector<32x1xf32> to vector<32x256xf32>
    %51 = arith.addf %47, %50 : vector<32x256xf32>
    %cst_27 = arith.constant 0.000000e+00 : f32
    %52 = vector.broadcast %cst_27 : f32 to vector<32x256xf32>
    %53 = arith.maximumf %51, %52 : vector<32x256xf32>
    %c0_28 = arith.constant 0 : index
    %c0_29 = arith.constant 0 : index
    %54 = vector.load %arg5[%c0_28, %c0_29] : memref<1x32xbf16, #tpu.memory_space<vmem>>, vector<1x32xbf16>
    %55 = arith.truncf %53 : vector<32x256xf32> to vector<32x256xbf16>
    %cst_30 = arith.constant dense<0.000000e+00> : vector<1x256xf32>
    %56 = tpu.matmul %54, %55, %cst_30 {dimension_numbers = #tpu.dot_dimension_numbers<[1], [0], [0], [1], [0, 0, 1, 1], [], []>} : vector<1x32xbf16>, vector<32x256xbf16>, vector<1x256xf32> -> vector<1x256xf32>
    %c0_31 = arith.constant 0 : index
    %c0_32 = arith.constant 0 : index
    %57 = vector.load %arg6[%c0_31, %c0_32] : memref<1x1xf32, #tpu.memory_space<vmem>>, vector<1x1xf32>
    %58 = vector.broadcast %57 : vector<1x1xf32> to vector<1x256xf32>
    %59 = arith.addf %56, %58 : vector<1x256xf32>
    %cst_33 = arith.constant 0.000000e+00 : f32
    %60 = vector.broadcast %cst_33 : f32 to vector<1x256xf32>
    %61 = arith.subf %60, %59 : vector<1x256xf32>
    %62 = math.exp %61 : vector<1x256xf32>
    %cst_34 = arith.constant 1.000000e+00 : f32
    %63 = vector.broadcast %cst_34 : f32 to vector<1x256xf32>
    %64 = arith.addf %63, %62 : vector<1x256xf32>
    %65 = tpu.reciprocal %64 {approx = true} : vector<1x256xf32> -> vector<1x256xf32>
    %c0_35 = arith.constant 0 : index
    %c0_36 = arith.constant 0 : index
    %66 = vector.load %arg7[%c0_35, %c0_36] : memref<1x256xf32, #tpu.memory_space<vmem>>, vector<1x256xf32>
    tpu.vector_store %arg7[%c0_35, %c0_36], %65 {strides = array<i32>} : memref<1x256xf32, #tpu.memory_space<vmem>>, vector<1x256xf32>,
    return
  }
  func.func @transform_0(%arg0: i32) -> (i32, i32) {
    %c0_i32 = arith.constant 0 : i32
    %c0_i32_0 = arith.constant 0 : i32
    return %c0_i32, %arg0 : i32, i32
  }
  func.func @transform_1(%arg0: i32) -> (i32, i32) {
    %c0_i32 = arith.constant 0 : i32
    %c0_i32_0 = arith.constant 0 : i32
    %c0_i32_1 = arith.constant 0 : i32
    return %c0_i32, %c0_i32_0 : i32, i32
  }
  func.func @transform_2(%arg0: i32) -> (i32, i32, i32) {
    %c0_i32 = arith.constant 0 : i32
    %c0_i32_0 = arith.constant 0 : i32
    %c0_i32_1 = arith.constant 0 : i32
    %c0_i32_2 = arith.constant 0 : i32
    return %c0_i32, %c0_i32_0, %c0_i32_1 : i32, i32, i32
  }
  func.func @transform_3(%arg0: i32) -> (i32, i32, i32) {
    %c0_i32 = arith.constant 0 : i32
    %c0_i32_0 = arith.constant 0 : i32
    %c0_i32_1 = arith.constant 0 : i32
    %c0_i32_2 = arith.constant 0 : i32
    return %c0_i32, %c0_i32_0, %c0_i32_1 : i32, i32, i32
  }
  func.func @transform_4(%arg0: i32) -> (i32, i32) {
    %c0_i32 = arith.constant 0 : i32
    %c0_i32_0 = arith.constant 0 : i32
    %c0_i32_1 = arith.constant 0 : i32
    return %c0_i32, %c0_i32_0 : i32, i32
  }
  func.func @transform_5(%arg0: i32) -> (i32, i32) {
    %c0_i32 = arith.constant 0 : i32
    %c0_i32_0 = arith.constant 0 : i32
    %c0_i32_1 = arith.constant 0 : i32
    return %c0_i32, %c0_i32_0 : i32, i32
  }
  func.func @transform_6(%arg0: i32) -> (i32, i32) {
    %c0_i32 = arith.constant 0 : i32
    %c0_i32_0 = arith.constant 0 : i32
    return %c0_i32, %arg0 : i32, i32
  }
}

</mosaic_0001>

<llo_original>
// kernel: tpu_custom_call.1
$region0: #{tpu_custom_call.1}
  #allocation0 [shape = 'u32[]', space=smem, size = 0x4, offset = 0x4, fixed_abs, tag = 'smem constant byte address 0x4 - core index']
  #allocation1 [shape = 'u32[72,128]{1,0:T(1,128)}', space=vmem, size = 0x9000, scoped, tag = 'internal scratch']
  #allocation2 [shape = 'f32[1,1]{1,0:T(1,128)S(1)}', space=vmem, size = 0x200, scoped, tag = 'scoped memory for tpu_custom_call.1']
  %s0 = inlined_call_operand.vmem [shape: f32[2,300], index: 0, kind: input, shape index: {}]
  %s1 = inlined_call_operand.vmem [shape: bf16[32,16], index: 1, kind: input, shape index: {}]
  %s2 = inlined_call_operand.vmem [shape: bf16[3,32,32], index: 2, kind: input, shape index: {}]
  %s3 = inlined_call_operand.vmem [shape: f32[3,32,1], index: 3, kind: input, shape index: {}]
  %s4 = inlined_call_operand.vmem [shape: bf16[1,32], index: 4, kind: input, shape index: {}]
  %s5 = inlined_call_operand.<no memory space> [shape: f32[1,1], index: 5, kind: input, shape index: {}]
  %s6 = inlined_call_operand.hbm [shape: f32[1,512], index: 6, kind: output, shape index: {}]
  %s7 = sld [smem:[#allocation0]]
  $region57: #{tpu_custom_call.1} parent=0
    _
  %s9 = ssub.s32 1, %s7
  %s10 = scalar_select 0, %s9, %s7
  %v11 = vstv %s5
  %12 = vst [vmem:[#allocation2] sm:$0x1] %v11
  $region1: #{tpu_custom_call.1} parent=0
    #allocation3 [shape = 'u8[2048]{0}', space=vmem, size = 0x800, scoped, tag = 'output window, operand 0']
    #allocation4 [shape = 's32[2]{0}', space=sflag, size = 0x8, scoped, tag = 'scoped memory for tpu_custom_call.1']
    %13 = vsyncpa [#allocation4], 0
    %s14 = scalar_lea.sflag [#allocation4], 1
    %15 = vsyncpa %s14, 0
    loop: start=0, step=1, limit=4
    $region2: #{tpu_custom_call.1} parent=1 // loop_pre_header
      _
    $region3: #{tpu_custom_call.1} parent=1 // loop_header
      %s17 = sphi 0, %s21
      %p18 = scmp.ge.s32.totalorder %s17, 4
      %s27 = sphi 0, %s29
      %s30 = sphi 0, %s27
      %s31 = sphi 0, %s30
      %s47 = sphi 0, %s31
      %s51 = sphi 0, %s51
      %s53 = sphi 0, %s51
      %s54 = sphi 0, %s53
      %s68 = sphi 0, %s54
      %s72 = sphi 0, %s72
      %s74 = sphi 0, %s72
      %s75 = sphi 0, %s74
      %s89 = sphi 0, %s75
      %s93 = sphi 0, %s93
      %s95 = sphi 0, %s93
      %s96 = sphi 0, %s95
      %s110 = sphi 0, %s96
      %s114 = sphi 0, %s114
      %s116 = sphi 0, %s114
      %s117 = sphi 0, %s116
      %s131 = sphi 0, %s117
      %s135 = sphi 0, %s135
      %s137 = sphi 0, %s135
      %s138 = sphi 0, %s137
      %s152 = sphi 0, %s138
      %s158 = sphi 0, %s160
      %s161 = sphi 0, %s158
      %s162 = sphi 0, %s161
      %s178 = sphi 0, %s162
    $region4: #{tpu_custom_call.1} parent=1 // loop_header_branch
      %20 = sbr.rel (%p18) target = $region8
    $region5: #{tpu_custom_call.1} parent=1 // loop_body
      %s22 = ssub.s32 %s17, 1
      %s23 = ssub.s32 %s17, 2
      %s24 = sadd.s32 %s17, 1
      %s25 = ssub.s32 %s17, %s24
      %p26 = scmp.eq.s32.totalorder %s25, 0
      %s28 = sadd.s32 %s27, 1
      %s29 = scalar_select %p26, %s27, %s28
      %p32 = pneg %p26
      %p33 = scmp.eq.s32.totalorder %s17, 1
      %p34 = por %p32, %p33
      %p35 = scmp.ne.s32.totalorder %s27, %s30
      %p36 = scmp.eq.s32.totalorder %s17, 0
      %p37 = por %p35, %p36
      %p38 = scmp.ne.s32.totalorder %s27, %s30
      %p39 = scmp.eq.s32.totalorder %s22, 1
      %p40 = por %p38, %p39
      %p41 = scmp.ne.s32.totalorder %s30, %s31
      %p42 = scmp.eq.s32.totalorder %s22, 0
      %p43 = por %p41, %p42
      %p44 = scmp.ne.s32.totalorder %s30, %s31
      %p45 = scmp.eq.s32.totalorder %s23, 1
      %p46 = por %p44, %p45
      %p48 = scmp.ne.s32.totalorder %s31, %s47
      %p49 = scmp.eq.s32.totalorder %s23, 0
      %p50 = por %p48, %p49
      %s52 = sadd.s32 %s51, 1
      %p55 = scmp.eq.s32.totalorder %s17, 1
      %p56 = scmp.ne.s32.totalorder %s51, %s53
      %p57 = scmp.eq.s32.totalorder %s17, 0
      %p58 = por %p56, %p57
      %p59 = scmp.ne.s32.totalorder %s51, %s53
      %p60 = scmp.eq.s32.totalorder %s22, 1
      %p61 = por %p59, %p60
      %p62 = scmp.ne.s32.totalorder %s53, %s54
      %p63 = scmp.eq.s32.totalorder %s22, 0
      %p64 = por %p62, %p63
      %p65 = scmp.ne.s32.totalorder %s53, %s54
      %p66 = scmp.eq.s32.totalorder %s23, 1
      %p67 = por %p65, %p66
      %p69 = scmp.ne.s32.totalorder %s54, %s68
      %p70 = scmp.eq.s32.totalorder %s23, 0
      %p71 = por %p69, %p70
      %s73 = sadd.s32 %s72, 1
      %p76 = scmp.eq.s32.totalorder %s17, 1
      %p77 = scmp.ne.s32.totalorder %s72, %s74
      %p78 = scmp.eq.s32.totalorder %s17, 0
      %p79 = por %p77, %p78
      %p80 = scmp.ne.s32.totalorder %s72, %s74
      %p81 = scmp.eq.s32.totalorder %s22, 1
      %p82 = por %p80, %p81
      %p83 = scmp.ne.s32.totalorder %s74, %s75
      %p84 = scmp.eq.s32.totalorder %s22, 0
      %p85 = por %p83, %p84
      %p86 = scmp.ne.s32.totalorder %s74, %s75
      %p87 = scmp.eq.s32.totalorder %s23, 1
      %p88 = por %p86, %p87
      %p90 = scmp.ne.s32.totalorder %s75, %s89
      %p91 = scmp.eq.s32.totalorder %s23, 0
      %p92 = por %p90, %p91
      %s94 = sadd.s32 %s93, 1
      %p97 = scmp.eq.s32.totalorder %s17, 1
      %p98 = scmp.ne.s32.totalorder %s93, %s95
      %p99 = scmp.eq.s32.totalorder %s17, 0
      %p100 = por %p98, %p99
      %p101 = scmp.ne.s32.totalorder %s93, %s95
      %p102 = scmp.eq.s32.totalorder %s22, 1
      %p103 = por %p101, %p102
      %p104 = scmp.ne.s32.totalorder %s95, %s96
      %p105 = scmp.eq.s32.totalorder %s22, 0
      %p106 = por %p104, %p105
      %p107 = scmp.ne.s32.totalorder %s95, %s96
      %p108 = scmp.eq.s32.totalorder %s23, 1
      %p109 = por %p107, %p108
      %p111 = scmp.ne.s32.totalorder %s96, %s110
      %p112 = scmp.eq.s32.totalorder %s23, 0
      %p113 = por %p111, %p112
      %s115 = sadd.s32 %s114, 1
      %p118 = scmp.eq.s32.totalorder %s17, 1
      %p119 = scmp.ne.s32.totalorder %s114, %s116
      %p120 = scmp.eq.s32.totalorder %s17, 0
      %p121 = por %p119, %p120
      %p122 = scmp.ne.s32.totalorder %s114, %s116
      %p123 = scmp.eq.s32.totalorder %s22, 1
      %p124 = por %p122, %p123
      %p125 = scmp.ne.s32.totalorder %s116, %s117
      %p126 = scmp.eq.s32.totalorder %s22, 0
      %p127 = por %p125, %p126
      %p128 = scmp.ne.s32.totalorder %s116, %s117
      %p129 = scmp.eq.s32.totalorder %s23, 1
      %p130 = por %p128, %p129
      %p132 = scmp.ne.s32.totalorder %s117, %s131
      %p133 = scmp.eq.s32.totalorder %s23, 0
      %p134 = por %p132, %p133
      %s136 = sadd.s32 %s135, 1
      %p139 = scmp.eq.s32.totalorder %s17, 1
      %p140 = scmp.ne.s32.totalorder %s135, %s137
      %p141 = scmp.eq.s32.totalorder %s17, 0
      %p142 = por %p140, %p141
      %p143 = scmp.ne.s32.totalorder %s135, %s137
      %p144 = scmp.eq.s32.totalorder %s22, 1
      %p145 = por %p143, %p144
      %p146 = scmp.ne.s32.totalorder %s137, %s138
      %p147 = scmp.eq.s32.totalorder %s22, 0
      %p148 = por %p146, %p147
      %p149 = scmp.ne.s32.totalorder %s137, %s138
      %p150 = scmp.eq.s32.totalorder %s23, 1
      %p151 = por %p149, %p150
      %p153 = scmp.ne.s32.totalorder %s138, %s152
      %p154 = scmp.eq.s32.totalorder %s23, 0
      %p155 = por %p153, %p154
      %s156 = ssub.s32 %s17, %s24
      %p157 = scmp.eq.s32.totalorder %s156, 0
      %s159 = sadd.s32 %s158, 1
      %s160 = scalar_select %p157, %s158, %s159
      %p163 = pneg %p157
      %p164 = scmp.eq.s32.totalorder %s17, 1
      %p165 = por %p163, %p164
      %p166 = scmp.ne.s32.totalorder %s158, %s161
      %p167 = scmp.eq.s32.totalorder %s17, 0
      %p168 = por %p166, %p167
      %p169 = scmp.ne.s32.totalorder %s158, %s161
      %p170 = scmp.eq.s32.totalorder %s22, 1
      %p171 = por %p169, %p170
      %p172 = scmp.ne.s32.totalorder %s161, %s162
      %p173 = scmp.eq.s32.totalorder %s22, 0
      %p174 = por %p172, %p173
      %p175 = scmp.ne.s32.totalorder %s161, %s162
      %p176 = scmp.eq.s32.totalorder %s23, 1
      %p177 = por %p175, %p176
      %p179 = scmp.ne.s32.totalorder %s162, %s178
      %p180 = scmp.eq.s32.totalorder %s23, 0
      %p181 = por %p179, %p180
      %p182 = scmp.le.s32.totalorder 1, %s17
      %p183 = scmp.lt.s32.totalorder %s17, 3
      %p184 = pnand %p182, %p183
      %p185 = pneg %p184
      // Predicated region
      $region9: #{tpu_custom_call.1} parent=5 // pred_check
        _
      $region10: #{tpu_custom_call.1} parent=5 // pred_check_branch
        %187 = sbr.rel (%p184) target = $region12
      $region11: #{tpu_custom_call.1} parent=5 // pred_region
        %s188 = ssub.s32 %s17, 1
        // Predicated region
        $region13: #{tpu_custom_call.1} parent=11 // pred_check
          %p189 = pneg %p64
        $region14: #{tpu_custom_call.1} parent=11 // pred_check_branch
          %191 = sbr.rel (%p189) target = $region16
        $region15: #{tpu_custom_call.1} parent=11 // pred_region
          _
        $region16: #{tpu_custom_call.1} parent=11 // pred_fallthru
          _
        // Predicated region
        $region17: #{tpu_custom_call.1} parent=11 // pred_check
          %p192 = pneg %p85
        $region18: #{tpu_custom_call.1} parent=11 // pred_check_branch
          %194 = sbr.rel (%p192) target = $region20
        $region19: #{tpu_custom_call.1} parent=11 // pred_region
          _
        $region20: #{tpu_custom_call.1} parent=11 // pred_fallthru
          _
        // Predicated region
        $region21: #{tpu_custom_call.1} parent=11 // pred_check
          %p195 = pneg %p106
        $region22: #{tpu_custom_call.1} parent=11 // pred_check_branch
          %197 = sbr.rel (%p195) target = $region24
        $region23: #{tpu_custom_call.1} parent=11 // pred_region
          _
        $region24: #{tpu_custom_call.1} parent=11 // pred_fallthru
          _
        // Predicated region
        $region25: #{tpu_custom_call.1} parent=11 // pred_check
          %p198 = pneg %p127
        $region26: #{tpu_custom_call.1} parent=11 // pred_check_branch
          %200 = sbr.rel (%p198) target = $region28
        $region27: #{tpu_custom_call.1} parent=11 // pred_region
          _
        $region28: #{tpu_custom_call.1} parent=11 // pred_fallthru
          _
        // Predicated region
        $region29: #{tpu_custom_call.1} parent=11 // pred_check
          %p201 = pneg %p148
        $region30: #{tpu_custom_call.1} parent=11 // pred_check_branch
          %203 = sbr.rel (%p201) target = $region32
        $region31: #{tpu_custom_call.1} parent=11 // pred_region
          _
        $region32: #{tpu_custom_call.1} parent=11 // pred_fallthru
          _
      $region12: #{tpu_custom_call.1} parent=5 // pred_fallthru
        _
      %p204 = scmp.lt.s32.totalorder %s17, 2
      // Predicated region
      $region33: #{tpu_custom_call.1} parent=5 // pred_check
        %p205 = pneg %p204
      $region34: #{tpu_custom_call.1} parent=5 // pred_check_branch
        %207 = sbr.rel (%p205) target = $region36
      $region35: #{tpu_custom_call.1} parent=5 // pred_region
        // Predicated region
        $region37: #{tpu_custom_call.1} parent=35 // pred_check
          %p208 = pneg %p37
        $region38: #{tpu_custom_call.1} parent=35 // pred_check_branch
          %210 = sbr.rel (%p208) target = $region40
        $region39: #{tpu_custom_call.1} parent=35 // pred_region
          %s211 = smul.u32 2, %s17
          %s212 = ssub.s32 3, %s211
          %p213 = scmp.lt.s32.totalorder %s212, 2
          %s214 = scalar_select %p213, %s212, 2
          %s215 = smul.u32 2, %s214
          %p216 = scmp.lt.s32.totalorder %s211, 2
          %s217 = scalar_select %p216, %s211, 2
          %s218 = smul.addr %s217, 2
          %s219 = scalar_lea.vmem %s0, %s218
          %s220 = smul.u32 2, %s17
          %s221 = ssub.s32 3, %s220
          %p222 = scmp.lt.s32.totalorder %s221, 2
          %s223 = scalar_select %p222, %s221, 2
          %s224 = smul.u32 2, %s223
        $region40: #{tpu_custom_call.1} parent=35 // pred_fallthru
          _
      $region36: #{tpu_custom_call.1} parent=5 // pred_fallthru
        _
      %p225 = scmp.le.s32.totalorder 1, %s17
      %p226 = scmp.lt.s32.totalorder %s17, 3
      %p227 = pnand %p225, %p226
      %p228 = pneg %p227
      // Predicated region
      $region41: #{tpu_custom_call.1} parent=5 // pred_check
        _
      $region42: #{tpu_custom_call.1} parent=5 // pred_check_branch
        %230 = sbr.rel (%p227) target = $region44
      $region43: #{tpu_custom_call.1} parent=5 // pred_region
        %s231 = ssub.s32 %s17, 1
        %s232 = smul.u32 2, %s22
        %s233 = ssub.s32 3, %s232
        %p234 = scmp.lt.s32.totalorder %s233, 2
        %s235 = scalar_select %p234, %s233, 2
        %s236 = smul.u32 2, %s235
        %p237 = scmp.lt.s32.totalorder %s232, 2
        %s238 = scalar_select %p237, %s232, 2
        %s239 = smul.addr %s238, 2
        %s240 = scalar_lea.vmem %s0, %s239
        %p241 = pneg %p43
        %p242 = pneg %p40
        %p243 = pneg %p64
        %p244 = pneg %p61
        %p245 = pneg %p85
        %p246 = pneg %p82
        %p247 = pneg %p106
        %p248 = pneg %p103
        %p249 = pneg %p127
        %p250 = pneg %p124
        %p251 = pneg %p148
        %p252 = pneg %p145
        %p253 = pneg %p174
        %p254 = pneg %p171
        %s255 = sand.u32 %s161, 1
        %s256 = scalar_lea.sflag [#allocation4], %s255
        %s257 = sand.u32 %s161, 1
        %s258 = smul.addr %s257, 2
        %s259 = scalar_lea.vmem [#allocation3], %s258
        %s260 = smul.u32 2, %s22
        %s261 = ssub.s32 3, %s260
        %p262 = scmp.lt.s32.totalorder %s261, 2
        %s263 = scalar_select %p262, %s261, 2
        %s264 = smul.u32 2, %s263
        %p265 = scmp.lt.s32.totalorder %s260, 2
        %s266 = scalar_select %p265, %s260, 2
        %s267 = smul.addr %s266, 2
        %s268 = scalar_lea.vmem %s0, %s267
        %s269 = smul.u32 2, %s22
        %s270 = ssub.s32 3, %s269
        %p271 = scmp.lt.s32.totalorder %s270, 2
        %s272 = scalar_select %p271, %s270, 2
        %s273 = smul.u32 2, %s272
        %s274 = smul.u32 2, %s22
        %v276 = vld [vmem:[%s268] sm:$0xf]
        %v277 = vmul.f32 %v276, 3.1415927
        %v278 = vand.u32 2147483647, %v277
        %vm279 = vcmp.le.f32.partialorder %v278, 0.7853982
        %vm280 = vcmp.lt.s32.totalorder %v277, 0
        %v281 = vand.u32 %v277, 2139095040
        %v282 = vshrl.u32 %v281, 23
        %v283 = vsub.s32 %v282, 127
        %v284 = vand.u32 2147483647, %v277
        %v285 = vand.u32 %v284, 8388607
        %v286 = vor.u32 %v285, 8388608
        %v287 = vsub.s32 0, %v286
        %v288 = vadd.s32 %v283, 1
        %vm289 = vcmp.gt.s32.totalorder %v288, 0
        %v290 = vsel %vm289, %v288, 0
        %v291 = vshrl.u32 %v290, 5
        %v292 = vand.u32 %v290, 31
        %v293 = vsub.s32 32, %v292
        %v294 = vshrl.u32 683565275, %v293
        %v295 = vshll.u32 683565275, %v292
        %v296 = vshrl.u32 2475754826, %v293
        %v297 = vor.u32 %v295, %v296
        %v298 = vshll.u32 2475754826, %v292
        %v299 = vshrl.u32 2131351028, %v293
        %v300 = vor.u32 %v298, %v299
        %v301 = vshll.u32 2131351028, %v292
        %v302 = vshrl.u32 2102212464, %v293
        %v303 = vor.u32 %v301, %v302
        %v304 = vshll.u32 2102212464, %v292
        %v305 = vshrl.u32 920167782, %v293
        %v306 = vor.u32 %v304, %v305
        %v307 = vshll.u32 920167782, %v292
        %v308 = vshrl.u32 1326507024, %v293
        %v309 = vor.u32 %v307, %v308
        %vm310 = vcmp.lt.s32.totalorder %v291, 1
        %vm311 = vcmp.lt.s32.totalorder %v291, 2
        %vm312 = vcmp.lt.s32.totalorder %v291, 3
        %vm313 = vcmp.lt.s32.totalorder %v291, 4
        %v314 = vsel %vm310, %v294, %v297
        %v315 = vsel %vm313, %v303, 2102212464
        %v316 = vsel %vm312, %v300, %v315
        %v317 = vsel %vm311, %v314, %v316
        %v318 = vsel %vm310, %v297, %v300
        %v319 = vsel %vm313, %v306, 920167782
        %v320 = vsel %vm312, %v303, %v319
        %v321 = vsel %vm311, %v318, %v320
        %v322 = vsel %vm310, %v300, %v303
        %v323 = vsel %vm313, %v309, 1326507024
        %v324 = vsel %vm312, %v306, %v323
        %v325 = vsel %vm311, %v322, %v324
        %v326 = vshll.u32 %v286, 8
        %v327 = vand.u32 %v326, 65535
        %v328 = vshrl.u32 %v326, 16
        %v329 = vand.u32 %v325, 65535
        %v330 = vshrl.u32 %v325, 16
        %v331 = vmul.u32 %v327, %v329
        %v332 = vmul.u32 %v327, %v330
        %v333 = vmul.u32 %v328, %v329
        %v334 = vmul.u32 %v328, %v330
        %v335 = vshll.u32 %v332, 16
        %v336 = vshrl.u32 %v332, 16
        %v337 = vshll.u32 %v333, 16
        %v338 = vshrl.u32 %v333, 16
        %vm339 = vc.u32 %v331, %v335
        %v340 = vsel %vm339, 1, 0
        %v341 = vadd.s32 %v331, %v335
        %v342 = vadd.s32 %v334, %v340
        %vm343 = vc.u32 %v341, %v337
        %v344 = vsel %vm343, 1, 0
        %v345 = vadd.s32 %v341, %v337
        %v346 = vadd.s32 %v342, %v344
        %v347 = vadd.s32 %v346, %v336
        %v348 = vadd.s32 %v347, %v338
        %v349 = vand.u32 %v326, 65535
        %v350 = vshrl.u32 %v326, 16
        %v351 = vand.u32 %v321, 65535
        %v352 = vshrl.u32 %v321, 16
        %v353 = vmul.u32 %v349, %v351
        %v354 = vmul.u32 %v349, %v352
        %v355 = vmul.u32 %v350, %v351
        %v356 = vmul.u32 %v350, %v352
        %v357 = vshll.u32 %v354, 16
        %v358 = vshrl.u32 %v354, 16
        %v359 = vshll.u32 %v355, 16
        %v360 = vshrl.u32 %v355, 16
        %vm361 = vc.u32 %v353, %v357
        %v362 = vsel %vm361, 1, 0
        %v363 = vadd.s32 %v353, %v357
        %v364 = vadd.s32 %v356, %v362
        %vm365 = vc.u32 %v363, %v359
        %v366 = vsel %vm365, 1, 0
        %v367 = vadd.s32 %v363, %v359
        %v368 = vadd.s32 %v364, %v366
        %v369 = vadd.s32 %v368, %v358
        %v370 = vadd.s32 %v369, %v360
        %v371 = vmul.u32 %v326, %v317
        %v372 = vadd.s32 %v348, %v367
        %vm373 = vc.u32 %v348, %v367
        %v374 = vadd.s32 %v370, 1
        %v375 = vsel %vm373, %v374, %v370
        %v376 = vadd.s32 %v371, %v375
        %v377 = vadd.s32 %v376, 536870912
        %v378 = vshrl.u32 %v377, 30
        %v379 = vshll.u32 %v378, 30
        %v380 = vsub.s32 %v376, %v379
        %vm381 = vcmp.lt.s32.totalorder %v380, 0
        %v382 = vsub.s32 0, %v380
        %v383 = vsel %vm381, %v382, %v380
        %v384 = vclz %v383
        %v385 = vsub.s32 %v384, 2
        %vm386 = vcmp.gt.s32.totalorder 0, %v385
        %v387 = vsel %vm386, 0, %v385
        %v388 = vsub.s32 32, %v387
        %v389 = vshll.u32 %v380, %v387
        %v390 = vshrl.u32 %v372, %v388
        %v391 = vor.u32 %v389, %v390
        %v392 = vsub.s32 4294967266, %v387
        %v393 = vadd.s32 %v392, 127
        %v394 = vshll.u32 %v393, 23
        %v395 = vor.u32 4788187, %v394
        %v396 = vand.u32 2147483647, %v395
        %v398 = vcvt.s32.f32 %v391
        %v399 = vmul.f32 %v398, %v396
        %v400 = vxor.u32 %v399, 2147483648
        %v401 = vsel %vm280, %v400, %v399
        %v402 = vsub.s32 4, %v378
        %v403 = vsel %vm280, %v402, %v378
        %v404 = vsel %vm279, %v277, %v401
        %v405 = vsel %vm279, 0, %v403
        %v406 = vmul.f32 %v404, %v404
        %v407 = vmul.f32 %v406, -0.001358992
        %v408 = vadd.f32 %v407, 0.041655596
        %v409 = vmul.f32 %v406, %v408
        %v410 = vadd.f32 %v409, -0.4999988
        %v411 = vmul.f32 %v406, %v410
        %v412 = vadd.f32 1.0, %v411
        %v413 = vmul.f32 %v404, %v404
        %v414 = vmul.f32 %v413, -0.00019511016
        %v415 = vadd.f32 %v414, 0.008332121
        %v416 = vmul.f32 %v413, %v415
        %v417 = vadd.f32 %v416, -0.16666654
        %v418 = vmul.f32 %v413, %v417
        %v419 = vadd.f32 %v418, 1.0
        %v420 = vmul.f32 %v419, %v404
        %vm421 = vweird.f32 %v277
        %v422 = vand.u32 %v405, 3
        %vm423 = vcmp.lt.s32.totalorder %v422, 2
        %vm424 = vcmp.eq.s32.totalorder %v422, 0
        %v425 = vxor.u32 %v420, 2147483648
        %v426 = vsel %vm424, %v412, %v425
        %vm427 = vcmp.eq.s32.totalorder %v422, 2
        %v428 = vxor.u32 %v412, 2147483648
        %v429 = vsel %vm427, %v428, %v420
        %v430 = vsel %vm423, %v426, %v429
        %v431 = vsel %vm421, nan, %v430
        %v432 = vand.u32 2147483647, %v277
        %vm433 = vcmp.le.f32.partialorder %v432, 0.7853982
        %vm434 = vcmp.lt.s32.totalorder %v277, 0
        %v435 = vand.u32 %v277, 2139095040
        %v436 = vshrl.u32 %v435, 23
        %v437 = vsub.s32 %v436, 127
        %v438 = vand.u32 2147483647, %v277
        %v439 = vand.u32 %v438, 8388607
        %v440 = vor.u32 %v439, 8388608
        %v441 = vsub.s32 0, %v440
        %v442 = vadd.s32 %v437, 1
        %vm443 = vcmp.gt.s32.totalorder %v442, 0
        %v444 = vsel %vm443, %v442, 0
        %v445 = vshrl.u32 %v444, 5
        %v446 = vand.u32 %v444, 31
        %v447 = vsub.s32 32, %v446
        %v448 = vshrl.u32 683565275, %v447
        %v449 = vshll.u32 683565275, %v446
        %v450 = vshrl.u32 2475754826, %v447
        %v451 = vor.u32 %v449, %v450
        %v452 = vshll.u32 2475754826, %v446
        %v453 = vshrl.u32 2131351028, %v447
        %v454 = vor.u32 %v452, %v453
        %v455 = vshll.u32 2131351028, %v446
        %v456 = vshrl.u32 2102212464, %v447
        %v457 = vor.u32 %v455, %v456
        %v458 = vshll.u32 2102212464, %v446
        %v459 = vshrl.u32 920167782, %v447
        %v460 = vor.u32 %v458, %v459
        %v461 = vshll.u32 920167782, %v446
        %v462 = vshrl.u32 1326507024, %v447
        %v463 = vor.u32 %v461, %v462
        %vm464 = vcmp.lt.s32.totalorder %v445, 1
        %vm465 = vcmp.lt.s32.totalorder %v445, 2
        %vm466 = vcmp.lt.s32.totalorder %v445, 3
        %vm467 = vcmp.lt.s32.totalorder %v445, 4
        %v468 = vsel %vm464, %v448, %v451
        %v469 = vsel %vm467, %v457, 2102212464
        %v470 = vsel %vm466, %v454, %v469
        %v471 = vsel %vm465, %v468, %v470
        %v472 = vsel %vm464, %v451, %v454
        %v473 = vsel %vm467, %v460, 920167782
        %v474 = vsel %vm466, %v457, %v473
        %v475 = vsel %vm465, %v472, %v474
        %v476 = vsel %vm464, %v454, %v457
        %v477 = vsel %vm467, %v463, 1326507024
        %v478 = vsel %vm466, %v460, %v477
        %v479 = vsel %vm465, %v476, %v478
        %v480 = vshll.u32 %v440, 8
        %v481 = vand.u32 %v480, 65535
        %v482 = vshrl.u32 %v480, 16
        %v483 = vand.u32 %v479, 65535
        %v484 = vshrl.u32 %v479, 16
        %v485 = vmul.u32 %v481, %v483
        %v486 = vmul.u32 %v481, %v484
        %v487 = vmul.u32 %v482, %v483
        %v488 = vmul.u32 %v482, %v484
        %v489 = vshll.u32 %v486, 16
        %v490 = vshrl.u32 %v486, 16
        %v491 = vshll.u32 %v487, 16
        %v492 = vshrl.u32 %v487, 16
        %vm493 = vc.u32 %v485, %v489
        %v494 = vsel %vm493, 1, 0
        %v495 = vadd.s32 %v485, %v489
        %v496 = vadd.s32 %v488, %v494
        %vm497 = vc.u32 %v495, %v491
        %v498 = vsel %vm497, 1, 0
        %v499 = vadd.s32 %v495, %v491
        %v500 = vadd.s32 %v496, %v498
        %v501 = vadd.s32 %v500, %v490
        %v502 = vadd.s32 %v501, %v492
        %v503 = vand.u32 %v480, 65535
        %v504 = vshrl.u32 %v480, 16
        %v505 = vand.u32 %v475, 65535
        %v506 = vshrl.u32 %v475, 16
        %v507 = vmul.u32 %v503, %v505
        %v508 = vmul.u32 %v503, %v506
        %v509 = vmul.u32 %v504, %v505
        %v510 = vmul.u32 %v504, %v506
        %v511 = vshll.u32 %v508, 16
        %v512 = vshrl.u32 %v508, 16
        %v513 = vshll.u32 %v509, 16
        %v514 = vshrl.u32 %v509, 16
        %vm515 = vc.u32 %v507, %v511
        %v516 = vsel %vm515, 1, 0
        %v517 = vadd.s32 %v507, %v511
        %v518 = vadd.s32 %v510, %v516
        %vm519 = vc.u32 %v517, %v513
        %v520 = vsel %vm519, 1, 0
        %v521 = vadd.s32 %v517, %v513
        %v522 = vadd.s32 %v518, %v520
        %v523 = vadd.s32 %v522, %v512
        %v524 = vadd.s32 %v523, %v514
        %v525 = vmul.u32 %v480, %v471
        %v526 = vadd.s32 %v502, %v521
        %vm527 = vc.u32 %v502, %v521
        %v528 = vadd.s32 %v524, 1
        %v529 = vsel %vm527, %v528, %v524
        %v530 = vadd.s32 %v525, %v529
        %v531 = vadd.s32 %v530, 536870912
        %v532 = vshrl.u32 %v531, 30
        %v533 = vshll.u32 %v532, 30
        %v534 = vsub.s32 %v530, %v533
        %vm535 = vcmp.lt.s32.totalorder %v534, 0
        %v536 = vsub.s32 0, %v534
        %v537 = vsel %vm535, %v536, %v534
        %v538 = vclz %v537
        %v539 = vsub.s32 %v538, 2
        %vm540 = vcmp.gt.s32.totalorder 0, %v539
        %v541 = vsel %vm540, 0, %v539
        %v542 = vsub.s32 32, %v541
        %v543 = vshll.u32 %v534, %v541
        %v544 = vshrl.u32 %v526, %v542
        %v545 = vor.u32 %v543, %v544
        %v546 = vsub.s32 4294967266, %v541
        %v547 = vadd.s32 %v546, 127
        %v548 = vshll.u32 %v547, 23
        %v549 = vor.u32 4788187, %v548
        %v550 = vand.u32 2147483647, %v549
        %v552 = vcvt.s32.f32 %v545
        %v553 = vmul.f32 %v552, %v550
        %v554 = vxor.u32 %v553, 2147483648
        %v555 = vsel %vm434, %v554, %v553
        %v556 = vsub.s32 4, %v532
        %v557 = vsel %vm434, %v556, %v532
        %v558 = vsel %vm433, %v277, %v555
        %v559 = vsel %vm433, 0, %v557
        %v560 = vmul.f32 %v558, %v558
        %v561 = vmul.f32 %v560, -0.001358992
        %v562 = vadd.f32 %v561, 0.041655596
        %v563 = vmul.f32 %v560, %v562
        %v564 = vadd.f32 %v563, -0.4999988
        %v565 = vmul.f32 %v560, %v564
        %v566 = vadd.f32 1.0, %v565
        %v567 = vmul.f32 %v558, %v558
        %v568 = vmul.f32 %v567, -0.00019511016
        %v569 = vadd.f32 %v568, 0.008332121
        %v570 = vmul.f32 %v567, %v569
        %v571 = vadd.f32 %v570, -0.16666654
        %v572 = vmul.f32 %v567, %v571
        %v573 = vadd.f32 %v572, 1.0
        %v574 = vmul.f32 %v573, %v558
        %vm575 = vweird.f32 %v277
        %v576 = vadd.s32 %v559, 3
        %v577 = vand.u32 %v576, 3
        %vm578 = vcmp.lt.s32.totalorder %v577, 2
        %vm579 = vcmp.eq.s32.totalorder %v577, 0
        %v580 = vxor.u32 %v574, 2147483648
        %v581 = vsel %vm579, %v566, %v580
        %vm582 = vcmp.eq.s32.totalorder %v577, 2
        %v583 = vxor.u32 %v566, 2147483648
        %v584 = vsel %vm582, %v583, %v574
        %v585 = vsel %vm578, %v581, %v584
        %v586 = vsel %vm575, nan, %v585
        %v587 = vmul.f32 %v431, %v431
        %v588 = vmul.f32 %v586, %v586
        %v589 = vsub.f32 %v587, %v588
        %v590 = vmul.f32 %v586, %v431
        %v591 = vadd.f32 %v590, %v590
        %v592 = vmul.f32 %v589, %v431
        %v593 = vmul.f32 %v591, %v586
        %v594 = vsub.f32 %v592, %v593
        %v595 = vmul.f32 %v591, %v431
        %v596 = vmul.f32 %v589, %v586
        %v597 = vadd.f32 %v595, %v596
        %599 = vst [vmem:[#allocation1] ss:$4 sm:$0xff] %v276
        %v600 = vld.sshfl [vmem:[#allocation1] sm:$0xff pattern:$0x73625140]
        %v601 = vld.sshfl [vmem:[#allocation1 + $0x8] sm:$0xff pattern:$0x73625140]
        %s605 = scalar_lea.vmem [#allocation1], 1
        %606 = vst [vmem:[%s605] ss:$4 sm:$0xff] %v431
        %v607 = vld.sshfl [vmem:[#allocation1] sm:$0xff pattern:$0x73625140]
        %v608 = vld.sshfl [vmem:[#allocation1 + $0x8] sm:$0xff pattern:$0x73625140]
        %s612 = scalar_lea.vmem [#allocation1], 2
        %613 = vst [vmem:[%s612] ss:$4 sm:$0xff] %v586
        %v614 = vld.sshfl [vmem:[#allocation1] sm:$0xff pattern:$0x73625140]
        %v615 = vld.sshfl [vmem:[#allocation1 + $0x8] sm:$0xff pattern:$0x73625140]
        %s619 = scalar_lea.vmem [#allocation1], 3
        %620 = vst [vmem:[%s619] ss:$4 sm:$0xff] %v589
        %v621 = vld.sshfl [vmem:[#allocation1] sm:$0xff pattern:$0x73625140]
        %v622 = vld.sshfl [vmem:[#allocation1 + $0x8] sm:$0xff pattern:$0x73625140]
        %626 = vst [vmem:[#allocation1] ss:$4 sm:$0xff] %v591
        %v627 = vld.sshfl [vmem:[#allocation1] sm:$0xff pattern:$0x73625140]
        %v628 = vld.sshfl [vmem:[#allocation1 + $0x8] sm:$0xff pattern:$0x73625140]
        %s632 = scalar_lea.vmem [#allocation1], 1
        %633 = vst [vmem:[%s632] ss:$4 sm:$0xff] %v594
        %v634 = vld.sshfl [vmem:[#allocation1] sm:$0xff pattern:$0x73625140]
        %v635 = vld.sshfl [vmem:[#allocation1 + $0x8] sm:$0xff pattern:$0x73625140]
        %s639 = scalar_lea.vmem [#allocation1], 2
        %640 = vst [vmem:[%s639] ss:$4 sm:$0xff] %v597
        %v641 = vld.sshfl [vmem:[#allocation1] sm:$0xff pattern:$0x73625140]
        %v642 = vld.sshfl [vmem:[#allocation1 + $0x8] sm:$0xff pattern:$0x73625140]
        %vm645 = vcmask 1041408
        %v646 = vsel %vm645, %v600, %v607
        %v647 = vsel %vm645, %v601, %v608
        %vm648 = vcmask 1043456
        %v649 = vsel %vm648, %v646, %v614
        %v650 = vsel %vm648, %v647, %v615
        %vm651 = vcmask 1045504
        %v652 = vsel %vm651, %v649, %v621
        %v653 = vsel %vm651, %v650, %v622
        %v654 = vsel %vm645, %v627, %v634
        %v655 = vsel %vm645, %v628, %v635
        %v656 = vsel %vm648, %v654, %v641
        %v657 = vsel %vm648, %v655, %v642
        %v658 = vsel %vm651, %v656, 1.0
        %v659 = vsel %vm651, %v657, 1.0
        %vm660 = vcmask 1046528
        %v661 = vsel %vm660, %v658, 1.0
        %v662 = vsel %vm660, %v659, 1.0
        %v663 = vpack.c.bf16 %v661, %v652
        %v664 = vpack.c.bf16 %v662, %v653
        %v665 = vld [vmem:[%s1] sm:$0xf]
        %v666 = vld [vmem:[%s1 + $0x4] sm:$0xf]
        %v667 = vld [vmem:[%s1 + $0x8] sm:$0xf]
        %v668 = vld [vmem:[%s1 + $0xc] sm:$0xf]
        %v673 = vunpack.c.l.b16 %v665
        %v674 = vunpack.c.l.b16 %v666
        %v675 = vunpack.c.l.b16 %v667
        %v676 = vunpack.c.l.b16 %v668
        %v677 = vpack.c.b16 %v674, %v673
        %v678 = vpack.c.b16 %v676, %v675
        %vm679 = vcmask 130048
        %v681 = vsel %vm679, %v677, 0
        %v684 = vsel %vm679, %v678, 0
        %686 = vmatpush.bf16.msra.mxu0 0
        %687 = vmatpush.bf16.msra.mxu0 0
        %688 = vmatpush.bf16.msra.mxu0 0
        %689 = vmatpush.bf16.msra.mxu0 0
        %690 = vmatpush.bf16.msra.mxu0 0
        %691 = vmatpush.bf16.msra.mxu0 0
        %692 = vmatpush.bf16.msra.mxu0 0
        %693 = vmatpush.bf16.msra.mxu0 %v663
        %694 = vmatmul.bf16.gmra.mxu0 %v681
        %v695 = vpop.f32.mrf.mxu0
        %v696 = vadd.f32 0.0, %v695
        %v697 = vpop.f32.mrf.mxu0
        %v698 = vadd.f32 0.0, %v697
        %699 = vmatmul.bf16.gmra.mxu0 %v684
        %v700 = vpop.f32.mrf.mxu0
        %v701 = vadd.f32 0.0, %v700
        %v702 = vpop.f32.mrf.mxu0
        %v703 = vadd.f32 0.0, %v702
        %704 = vdwg.mxu0
        %705 = vmatpush.bf16.msra.mxu0 0
        %706 = vmatpush.bf16.msra.mxu0 0
        %707 = vmatpush.bf16.msra.mxu0 0
        %708 = vmatpush.bf16.msra.mxu0 0
        %709 = vmatpush.bf16.msra.mxu0 0
        %710 = vmatpush.bf16.msra.mxu0 0
        %711 = vmatpush.bf16.msra.mxu0 0
        %712 = vmatpush.bf16.msra.mxu0 %v664
        %713 = vmatmul.bf16.gmra.mxu0 %v681
        %v714 = vpop.f32.mrf.mxu0
        %v715 = vadd.f32 0.0, %v714
        %v716 = vpop.f32.mrf.mxu0
        %v717 = vadd.f32 0.0, %v716
        %718 = vmatmul.bf16.gmra.mxu0 %v684
        %v719 = vpop.f32.mrf.mxu0
        %v720 = vadd.f32 0.0, %v719
        %v721 = vpop.f32.mrf.mxu0
        %v722 = vadd.f32 0.0, %v721
        %723 = vdwg.mxu0
        %v724 = vmax.f32 %v696, 0.0
        %v725 = vmax.f32 %v715, 0.0
        %v726 = vmax.f32 %v698, 0.0
        %v727 = vmax.f32 %v717, 0.0
        %v728 = vmax.f32 %v701, 0.0
        %v729 = vmax.f32 %v720, 0.0
        %v730 = vmax.f32 %v703, 0.0
        %v731 = vmax.f32 %v722, 0.0
        %v732 = vld [vmem:[%s2] sm:$0xf]
        %v733 = vld [vmem:[%s2 + $0x4] sm:$0xf]
        %v734 = vld [vmem:[%s2 + $0x8] sm:$0xf]
        %v735 = vld [vmem:[%s2 + $0xc] sm:$0xf]
        %v736 = vpack.c.bf16 %v726, %v724
        %v737 = vpack.c.bf16 %v727, %v725
        %v738 = vpack.c.bf16 %v730, %v728
        %v739 = vpack.c.bf16 %v731, %v729
        %v740 = vld [vmem:[%s3] sm:$0xff]
        %v741 = vld [vmem:[%s3 + $0x8] sm:$0xff]
        %v742 = vld [vmem:[%s3 + $0x10] sm:$0xff]
        %v743 = vld [vmem:[%s3 + $0x18] sm:$0xff]
        %745 = vset.pattern.permute.xlu0 0
        %746 = vperm.xlu0 %745, %v740
        %v747 = vpop.permute.xlu0 %746
        %750 = vset.pattern.permute.xlu0 0
        %751 = vperm.xlu0 %750, %v741
        %v752 = vpop.permute.xlu0 %751
        %755 = vset.pattern.permute.xlu0 0
        %756 = vperm.xlu0 %755, %v742
        %v757 = vpop.permute.xlu0 %756
        %760 = vset.pattern.permute.xlu0 0
        %761 = vperm.xlu0 %760, %v743
        %v762 = vpop.permute.xlu0 %761
        %v768 = vunpack.c.l.b16 %v732
        %v769 = vunpack.c.l.b16 %v733
        %v770 = vunpack.c.l.b16 %v734
        %v771 = vunpack.c.l.b16 %v735
        %v772 = vpack.c.b16 %v769, %v768
        %v773 = vpack.c.b16 %v771, %v770
        %vm774 = vcmask 261120
        %v776 = vsel %vm774, %v772, 0
        %v779 = vsel %vm774, %v773, 0
        %781 = vmatpush.bf16.msra.mxu0 0
        %782 = vmatpush.bf16.msra.mxu0 0
        %783 = vmatpush.bf16.msra.mxu0 0
        %784 = vmatpush.bf16.msra.mxu0 0
        %785 = vmatpush.bf16.msra.mxu0 0
        %786 = vmatpush.bf16.msra.mxu0 0
        %787 = vmatpush.bf16.msra.mxu0 %v738
        %788 = vmatpush.bf16.msra.mxu0 %v736
        %789 = vmatmul.bf16.gmra.mxu0 %v776
        %v790 = vpop.f32.mrf.mxu0
        %v791 = vadd.f32 %v747, %v790
        %v792 = vpop.f32.mrf.mxu0
        %v793 = vadd.f32 %v752, %v792
        %794 = vmatmul.bf16.gmra.mxu0 %v779
        %v795 = vpop.f32.mrf.mxu0
        %v796 = vadd.f32 %v757, %v795
        %v797 = vpop.f32.mrf.mxu0
        %v798 = vadd.f32 %v762, %v797
        %799 = vdwg.mxu0
        %800 = vmatpush.bf16.msra.mxu0 0
        %801 = vmatpush.bf16.msra.mxu0 0
        %802 = vmatpush.bf16.msra.mxu0 0
        %803 = vmatpush.bf16.msra.mxu0 0
        %804 = vmatpush.bf16.msra.mxu0 0
        %805 = vmatpush.bf16.msra.mxu0 0
        %806 = vmatpush.bf16.msra.mxu0 %v739
        %807 = vmatpush.bf16.msra.mxu0 %v737
        %808 = vmatmul.bf16.gmra.mxu0 %v776
        %v809 = vpop.f32.mrf.mxu0
        %v810 = vadd.f32 %v747, %v809
        %v811 = vpop.f32.mrf.mxu0
        %v812 = vadd.f32 %v752, %v811
        %813 = vmatmul.bf16.gmra.mxu0 %v779
        %v814 = vpop.f32.mrf.mxu0
        %v815 = vadd.f32 %v757, %v814
        %v816 = vpop.f32.mrf.mxu0
        %v817 = vadd.f32 %v762, %v816
        %818 = vdwg.mxu0
        %v819 = vmax.f32 %v791, 0.0
        %v820 = vmax.f32 %v810, 0.0
        %v821 = vmax.f32 %v793, 0.0
        %v822 = vmax.f32 %v812, 0.0
        %v823 = vmax.f32 %v796, 0.0
        %v824 = vmax.f32 %v815, 0.0
        %v825 = vmax.f32 %v798, 0.0
        %v826 = vmax.f32 %v817, 0.0
        %s827 = scalar_lea.vmem %s2, 16
        %v828 = vld [vmem:[%s827] sm:$0xf]
        %v829 = vld [vmem:[%s827 + $0x4] sm:$0xf]
        %v830 = vld [vmem:[%s827 + $0x8] sm:$0xf]
        %v831 = vld [vmem:[%s827 + $0xc] sm:$0xf]
        %v832 = vpack.c.bf16 %v821, %v819
        %v833 = vpack.c.bf16 %v822, %v820
        %v834 = vpack.c.bf16 %v825, %v823
        %v835 = vpack.c.bf16 %v826, %v824
        %s836 = scalar_lea.vmem %s3, 32
        %v837 = vld [vmem:[%s836] sm:$0xff]
        %v838 = vld [vmem:[%s836 + $0x8] sm:$0xff]
        %v839 = vld [vmem:[%s836 + $0x10] sm:$0xff]
        %v840 = vld [vmem:[%s836 + $0x18] sm:$0xff]
        %842 = vset.pattern.permute.xlu0 0
        %843 = vperm.xlu0 %842, %v837
        %v844 = vpop.permute.xlu0 %843
        %847 = vset.pattern.permute.xlu0 0
        %848 = vperm.xlu0 %847, %v838
        %v849 = vpop.permute.xlu0 %848
        %852 = vset.pattern.permute.xlu0 0
        %853 = vperm.xlu0 %852, %v839
        %v854 = vpop.permute.xlu0 %853
        %857 = vset.pattern.permute.xlu0 0
        %858 = vperm.xlu0 %857, %v840
        %v859 = vpop.permute.xlu0 %858
        %v865 = vunpack.c.l.b16 %v828
        %v866 = vunpack.c.l.b16 %v829
        %v867 = vunpack.c.l.b16 %v830
        %v868 = vunpack.c.l.b16 %v831
        %v869 = vpack.c.b16 %v866, %v865
        %v870 = vpack.c.b16 %v868, %v867
        %v872 = vsel %vm774, %v869, 0
        %v875 = vsel %vm774, %v870, 0
        %877 = vmatpush.bf16.msra.mxu0 0
        %878 = vmatpush.bf16.msra.mxu0 0
        %879 = vmatpush.bf16.msra.mxu0 0
        %880 = vmatpush.bf16.msra.mxu0 0
        %881 = vmatpush.bf16.msra.mxu0 0
        %882 = vmatpush.bf16.msra.mxu0 0
        %883 = vmatpush.bf16.msra.mxu0 %v834
        %884 = vmatpush.bf16.msra.mxu0 %v832
        %885 = vmatmul.bf16.gmra.mxu0 %v872
        %v886 = vpop.f32.mrf.mxu0
        %v887 = vadd.f32 %v844, %v886
        %v888 = vpop.f32.mrf.mxu0
        %v889 = vadd.f32 %v849, %v888
        %890 = vmatmul.bf16.gmra.mxu0 %v875
        %v891 = vpop.f32.mrf.mxu0
        %v892 = vadd.f32 %v854, %v891
        %v893 = vpop.f32.mrf.mxu0
        %v894 = vadd.f32 %v859, %v893
        %895 = vdwg.mxu0
        %896 = vmatpush.bf16.msra.mxu0 0
        %897 = vmatpush.bf16.msra.mxu0 0
        %898 = vmatpush.bf16.msra.mxu0 0
        %899 = vmatpush.bf16.msra.mxu0 0
        %900 = vmatpush.bf16.msra.mxu0 0
        %901 = vmatpush.bf16.msra.mxu0 0
        %902 = vmatpush.bf16.msra.mxu0 %v835
        %903 = vmatpush.bf16.msra.mxu0 %v833
        %904 = vmatmul.bf16.gmra.mxu0 %v872
        %v905 = vpop.f32.mrf.mxu0
        %v906 = vadd.f32 %v844, %v905
        %v907 = vpop.f32.mrf.mxu0
        %v908 = vadd.f32 %v849, %v907
        %909 = vmatmul.bf16.gmra.mxu0 %v875
        %v910 = vpop.f32.mrf.mxu0
        %v911 = vadd.f32 %v854, %v910
        %v912 = vpop.f32.mrf.mxu0
        %v913 = vadd.f32 %v859, %v912
        %914 = vdwg.mxu0
        %v915 = vmax.f32 %v887, 0.0
        %v916 = vmax.f32 %v906, 0.0
        %v917 = vmax.f32 %v889, 0.0
        %v918 = vmax.f32 %v908, 0.0
        %v919 = vmax.f32 %v892, 0.0
        %v920 = vmax.f32 %v911, 0.0
        %v921 = vmax.f32 %v894, 0.0
        %v922 = vmax.f32 %v913, 0.0
        %s923 = scalar_lea.vmem %s2, 32
        %v924 = vld [vmem:[%s923] sm:$0xf]
        %v925 = vld [vmem:[%s923 + $0x4] sm:$0xf]
        %v926 = vld [vmem:[%s923 + $0x8] sm:$0xf]
        %v927 = vld [vmem:[%s923 + $0xc] sm:$0xf]
        %v928 = vpack.c.bf16 %v917, %v915
        %v929 = vpack.c.bf16 %v918, %v916
        %v930 = vpack.c.bf16 %v921, %v919
        %v931 = vpack.c.bf16 %v922, %v920
        %s932 = scalar_lea.vmem %s3, 64
        %v933 = vld [vmem:[%s932] sm:$0xff]
        %v934 = vld [vmem:[%s932 + $0x8] sm:$0xff]
        %v935 = vld [vmem:[%s932 + $0x10] sm:$0xff]
        %v936 = vld [vmem:[%s932 + $0x18] sm:$0xff]
        %938 = vset.pattern.permute.xlu0 0
        %939 = vperm.xlu0 %938, %v933
        %v940 = vpop.permute.xlu0 %939
        %943 = vset.pattern.permute.xlu0 0
        %944 = vperm.xlu0 %943, %v934
        %v945 = vpop.permute.xlu0 %944
        %948 = vset.pattern.permute.xlu0 0
        %949 = vperm.xlu0 %948, %v935
        %v950 = vpop.permute.xlu0 %949
        %953 = vset.pattern.permute.xlu0 0
        %954 = vperm.xlu0 %953, %v936
        %v955 = vpop.permute.xlu0 %954
        %v961 = vunpack.c.l.b16 %v924
        %v962 = vunpack.c.l.b16 %v925
        %v963 = vunpack.c.l.b16 %v926
        %v964 = vunpack.c.l.b16 %v927
        %v965 = vpack.c.b16 %v962, %v961
        %v966 = vpack.c.b16 %v964, %v963
        %v968 = vsel %vm774, %v965, 0
        %v971 = vsel %vm774, %v966, 0
        %973 = vmatpush.bf16.msra.mxu0 0
        %974 = vmatpush.bf16.msra.mxu0 0
        %975 = vmatpush.bf16.msra.mxu0 0
        %976 = vmatpush.bf16.msra.mxu0 0
        %977 = vmatpush.bf16.msra.mxu0 0
        %978 = vmatpush.bf16.msra.mxu0 0
        %979 = vmatpush.bf16.msra.mxu0 %v930
        %980 = vmatpush.bf16.msra.mxu0 %v928
        %981 = vmatmul.bf16.gmra.mxu0 %v968
        %v982 = vpop.f32.mrf.mxu0
        %v983 = vadd.f32 %v940, %v982
        %v984 = vpop.f32.mrf.mxu0
        %v985 = vadd.f32 %v945, %v984
        %986 = vmatmul.bf16.gmra.mxu0 %v971
        %v987 = vpop.f32.mrf.mxu0
        %v988 = vadd.f32 %v950, %v987
        %v989 = vpop.f32.mrf.mxu0
        %v990 = vadd.f32 %v955, %v989
        %991 = vdwg.mxu0
        %992 = vmatpush.bf16.msra.mxu0 0
        %993 = vmatpush.bf16.msra.mxu0 0
        %994 = vmatpush.bf16.msra.mxu0 0
        %995 = vmatpush.bf16.msra.mxu0 0
        %996 = vmatpush.bf16.msra.mxu0 0
        %997 = vmatpush.bf16.msra.mxu0 0
        %998 = vmatpush.bf16.msra.mxu0 %v931
        %999 = vmatpush.bf16.msra.mxu0 %v929
        %1000 = vmatmul.bf16.gmra.mxu0 %v968
        %v1001 = vpop.f32.mrf.mxu0
        %v1002 = vadd.f32 %v940, %v1001
        %v1003 = vpop.f32.mrf.mxu0
        %v1004 = vadd.f32 %v945, %v1003
        %1005 = vmatmul.bf16.gmra.mxu0 %v971
        %v1006 = vpop.f32.mrf.mxu0
        %v1007 = vadd.f32 %v950, %v1006
        %v1008 = vpop.f32.mrf.mxu0
        %v1009 = vadd.f32 %v955, %v1008
        %1010 = vdwg.mxu0
        %v1011 = vmax.f32 %v983, 0.0
        %v1012 = vmax.f32 %v1002, 0.0
        %v1013 = vmax.f32 %v985, 0.0
        %v1014 = vmax.f32 %v1004, 0.0
        %v1015 = vmax.f32 %v988, 0.0
        %v1016 = vmax.f32 %v1007, 0.0
        %v1017 = vmax.f32 %v990, 0.0
        %v1018 = vmax.f32 %v1009, 0.0
        %v1019 = vld [vmem:[%s4] sm:$0x1]
        %v1020 = vpack.c.bf16 %v1013, %v1011
        %v1021 = vpack.c.bf16 %v1014, %v1012
        %v1022 = vpack.c.bf16 %v1017, %v1015
        %v1023 = vpack.c.bf16 %v1018, %v1016
        %v1024 = vld [vmem:[#allocation2] sm:$0x1]
        %1026 = vset.pattern.permute.xlu0 0
        %1027 = vperm.xlu0 %1026, %v1024
        %v1028 = vpop.permute.xlu0 %1027
        %v1030 = vperm.slane %v1028, 0
        %v1032 = vsel %vm774, %v1019, 0
        %1034 = vmatpush.bf16.msra.mxu0 0
        %1035 = vmatpush.bf16.msra.mxu0 0
        %1036 = vmatpush.bf16.msra.mxu0 0
        %1037 = vmatpush.bf16.msra.mxu0 0
        %1038 = vmatpush.bf16.msra.mxu0 0
        %1039 = vmatpush.bf16.msra.mxu0 0
        %1040 = vmatpush.bf16.msra.mxu0 %v1022
        %1041 = vmatpush.bf16.msra.mxu0 %v1020
        %1042 = vmatmul.bf16.gmra.mxu0 %v1032
        %v1043 = vpop.f32.mrf.mxu0
        %v1044 = vadd.f32 %v1030, %v1043
        %v1045 = vpop.f32.mrf.mxu0
        %1046 = vdwg.mxu0
        %1047 = vmatpush.bf16.msra.mxu0 0
        %1048 = vmatpush.bf16.msra.mxu0 0
        %1049 = vmatpush.bf16.msra.mxu0 0
        %1050 = vmatpush.bf16.msra.mxu0 0
        %1051 = vmatpush.bf16.msra.mxu0 0
        %1052 = vmatpush.bf16.msra.mxu0 0
        %1053 = vmatpush.bf16.msra.mxu0 %v1023
        %1054 = vmatpush.bf16.msra.mxu0 %v1021
        %1055 = vmatmul.bf16.gmra.mxu0 %v1032
        %v1056 = vpop.f32.mrf.mxu0
        %v1057 = vadd.f32 %v1030, %v1056
        %v1058 = vpop.f32.mrf.mxu0
        %1059 = vdwg.mxu0
        %v1060 = vsub.f32 0.0, %v1044
        %v1061 = vsub.f32 0.0, %v1057
        %v1062 = vmul.f32 %v1060, 1.442695
        %v1063 = vpow.pop %v1062
        %v1064 = vmul.f32 %v1061, 1.442695
        %v1065 = vpow.pop %v1064
        %v1066 = vadd.f32 %v1063, 1.0
        %v1067 = vadd.f32 %v1065, 1.0
        %v1068 = vrcp.pop %v1066
        %v1069 = vrcp.pop %v1067
        %v1072 = vrot.slane %v1069, 7
        %vm1073 = vcmask 1040384
        %v1074 = vsel %vm1073, %v1068, %v1072
        %v1076 = vlaneseq
        %vm1077 = vcmp.ge.s32.totalorder %v1076, 0
        %vm1078 = vcmp.lt.s32.totalorder %v1076, 256
        %vm1079 = vmand %vm1077, %vm1078
        %1080 = vst.msk [vmem:[%s259] sm:$0x3] %vm1079, %v1074
        %s1081 = sand.u32 %s161, 1
        %s1082 = scalar_lea.sflag [#allocation4], %s1081
        %s1083 = sand.u32 %s161, 1
        %s1084 = smul.addr %s1083, 2
        %s1085 = scalar_lea.vmem [#allocation3], %s1084
        // Predicated region
        $region45: #{tpu_custom_call.1} parent=43 // pred_check
          %p1086 = pneg %p171
        $region46: #{tpu_custom_call.1} parent=43 // pred_check_branch
          %1088 = sbr.rel (%p1086) target = $region48
        $region47: #{tpu_custom_call.1} parent=43 // pred_region
          %s1089 = smul.u32 2, %s22
          %1091 = vsyncadd %s1082, 0
          %s1092 = scalar_lea.hbm %s6, %s1089
          %s1094 = sshll.u32 %s1085, 4
          %s1095 = int_to_ptr.vmem [resolvable:$true] %s1094
          %s1096 = sshll.u32 %s1092, 4
          %s1097 = int_to_ptr.hbm [resolvable:$true] %s1096
          %1099 = dma.vmem_to_hbm [thread:$0]  %s1095, 32, %s1097, %s1082
        $region48: #{tpu_custom_call.1} parent=43 // pred_fallthru
          _
      $region44: #{tpu_custom_call.1} parent=5 // pred_fallthru
        _
      %p1100 = scmp.le.s32.totalorder 2, %s17
      // Predicated region
      $region49: #{tpu_custom_call.1} parent=5 // pred_check
        %p1101 = pneg %p1100
      $region50: #{tpu_custom_call.1} parent=5 // pred_check_branch
        %1103 = sbr.rel (%p1101) target = $region52
      $region51: #{tpu_custom_call.1} parent=5 // pred_region
        %s1104 = ssub.s32 %s17, 2
        // Predicated region
        $region53: #{tpu_custom_call.1} parent=51 // pred_check
          %p1105 = pneg %p177
        $region54: #{tpu_custom_call.1} parent=51 // pred_check_branch
          %1107 = sbr.rel (%p1105) target = $region56
        $region55: #{tpu_custom_call.1} parent=51 // pred_region
          %s1108 = sand.u32 %s162, 1
          %s1109 = scalar_lea.sflag [#allocation4], %s1108
          %s1110 = sand.u32 %s162, 1
          %s1111 = smul.addr %s1110, 2
          %s1112 = scalar_lea.vmem [#allocation3], %s1111
          %1114 = dma.done %s1109, 32
        $region56: #{tpu_custom_call.1} parent=51 // pred_fallthru
          _
      $region52: #{tpu_custom_call.1} parent=5 // pred_fallthru
        _
    $region6: #{tpu_custom_call.1} parent=1 // loop_footer
      %s21 = sadd.s32 1, %s17
    $region7: #{tpu_custom_call.1} parent=1 // loop_footer_branch
      %16 = sbr.rel target = $region3
    $region8: #{tpu_custom_call.1} parent=1 // loop_exit
      _
    %1115 = vsyncpa [#allocation4], 1
    %s1116 = scalar_lea.sflag [#allocation4], 1
    %1117 = vsyncpa %s1116, 1

</llo_original>
